<compile_context>
chip_gen: v5e
topology: v5e:2x2
jax: 0.10.0
libtpu: 0.0.40
codegen_flags: <defaults>
</compile_context>

<pallas_src>
import functools

import jax
import jax.numpy as jnp
from jax.experimental import pallas as pl
from jax.experimental.pallas import tpu as pltpu


def _round_up(n: int, m: int) -> int:
    return ((n + m - 1) // m) * m


def digit_model_kernel(x_ref, w1_ref, b1_ref, w2_ref, b2_ref, out_ref):
    # fc1: [TB, Dp] bf16 @ [Dp, Hp] bf16 -> f32 accumulate on the MXU.
    h = jnp.dot(x_ref[...], w1_ref[...], preferred_element_type=jnp.float32)
    # Bias + ReLU in f32 on the VPU (keep element-wise math in f32; v5e has
    # no bf16 VPU).
    h = jnp.maximum(h + b1_ref[...], 0.0)
    # fc2: cast activations to bf16 for the MXU, accumulate in f32.
    out = jnp.dot(h.astype(jnp.bfloat16), w2_ref[...],
                  preferred_element_type=jnp.float32)
    out_ref[...] = (out + b2_ref[...]).astype(out_ref.dtype)


def digit_model_forward(x, w1, b1, w2, b2, *, block_b: int = 1024):
    """Forward pass of DigitModel.

    x : [B, D] float32
    w1: [H, D], b1: [H]   (PyTorch nn.Linear layout, weight = [out, in])
    w2: [C, H], b2: [C]
    returns [B, C] float32
    """
    B, D = x.shape
    H = w1.shape[0]
    C = w2.shape[0]

    LANE, SUBLANE = 128, 8
    Dp = _round_up(D, LANE)
    Hp = _round_up(H, LANE)
    Cp = _round_up(C, LANE)
    # Batch tile: multiple of 8 sublanes, no bigger than the (rounded) batch.
    TB = min(block_b, _round_up(B, SUBLANE))
    Bp = _round_up(B, TB)

    # Zero-pad to lane-dense shapes; cast matmul operands to bf16 (halves HBM
    # traffic on this mem-bound problem), keep biases in f32.
    xp = jnp.pad(x.astype(jnp.bfloat16), ((0, Bp - B), (0, Dp - D)))
    w1p = jnp.pad(w1.T.astype(jnp.bfloat16), ((0, Dp - D), (0, Hp - H)))
    b1p = jnp.pad(b1.astype(jnp.float32), (0, Hp - H)).reshape(1, Hp)
    w2p = jnp.pad(w2.T.astype(jnp.bfloat16), ((0, Hp - H), (0, Cp - C)))
    b2p = jnp.pad(b2.astype(jnp.float32), (0, Cp - C)).reshape(1, Cp)

    grid = (Bp // TB,)
    flops = 2 * Bp * Dp * Hp + 2 * Bp * Hp * Cp
    bytes_accessed = (xp.size * 2 + w1p.size * 2 + w2p.size * 2
                      + b1p.size * 4 + b2p.size * 4 + Bp * Cp * 4)

    out_padded = pl.pallas_call(
        digit_model_kernel,
        out_shape=jax.ShapeDtypeStruct((Bp, Cp), jnp.float32),
        grid_spec=pl.GridSpec(
            grid=grid,
            in_specs=[
                pl.BlockSpec((TB, Dp), lambda i: (i, 0)),   # x tile streams
                pl.BlockSpec((Dp, Hp), lambda i: (0, 0)),   # W1^T resident
                pl.BlockSpec((1, Hp), lambda i: (0, 0)),    # b1 resident
                pl.BlockSpec((Hp, Cp), lambda i: (0, 0)),   # W2^T resident
                pl.BlockSpec((1, Cp), lambda i: (0, 0)),    # b2 resident
            ],
            out_specs=pl.BlockSpec((TB, Cp), lambda i: (i, 0)),
        ),
        compiler_params=pltpu.CompilerParams(
            dimension_semantics=("parallel",),   # batch tiles -> both v7x TCs
        ),
        cost_estimate=pl.CostEstimate(
            flops=flops, transcendentals=0, bytes_accessed=bytes_accessed),
    )(xp, w1p, b1p, w2p, b2p)

    # Slice off batch padding and the zero-padded class lanes.
    return out_padded[:B, :C]


def init_params(key, input_dim, hidden_dim, num_classes):
    """Deterministic init mimicking nn.Linear's uniform(-1/sqrt(fan_in), +...).

    Returns weights in PyTorch layout: W1 [H, D], b1 [H], W2 [C, H], b2 [C].
    """
    k1, k2, k3, k4 = jax.random.split(key, 4)
    bound1 = 1.0 / jnp.sqrt(input_dim)
    bound2 = 1.0 / jnp.sqrt(hidden_dim)
    w1 = jax.random.uniform(k1, (hidden_dim, input_dim), jnp.float32,
                            -bound1, bound1)
    b1 = jax.random.uniform(k2, (hidden_dim,), jnp.float32, -bound1, bound1)
    w2 = jax.random.uniform(k3, (num_classes, hidden_dim), jnp.float32,
                            -bound2, bound2)
    b2 = jax.random.uniform(k4, (num_classes,), jnp.float32, -bound2, bound2)
    return w1, b1, w2, b2


if __name__ == "__main__":
    # Small but non-trivial: batch=512 with block_b=256 -> a 2-step grid that
    # exercises the batch-tiled pipeline. (For a true tiny batch like 8, a
    # plain XLA fusion would be preferable to any hand kernel.)
    batch = 512
    input_dim = 64      # flattened 8x8 sklearn digits
    hidden_dim = 32
    num_classes = 10

    key = jax.random.PRNGKey(0)
    kx, kp = jax.random.split(key)
    x = jax.random.normal(kx, (batch, input_dim), jnp.float32)
    w1, b1, w2, b2 = init_params(kp, input_dim, hidden_dim, num_classes)

    fwd = jax.jit(functools.partial(digit_model_forward, block_b=256))
    out = jax.block_until_ready(fwd(x, w1, b1, w2, b2))
    assert out.shape == (batch, num_classes)

    # Reference 1: same bf16-operand / f32-accumulate math in plain JAX.
    xb = x.astype(jnp.bfloat16)
    w1b = w1.T.astype(jnp.bfloat16)
    w2b = w2.T.astype(jnp.bfloat16)
    h_ref = jnp.maximum(
        jnp.dot(xb, w1b, preferred_element_type=jnp.float32) + b1, 0.0)
    ref_bf16 = jnp.dot(h_ref.astype(jnp.bfloat16), w2b,
                       preferred_element_type=jnp.float32) + b2
    assert jnp.allclose(out, ref_bf16, atol=2e-3, rtol=2e-3), \
        float(jnp.max(jnp.abs(out - ref_bf16)))

    # Reference 2: full-precision f32 math (looser tolerance for bf16 inputs).
    ref_f32 = jnp.maximum(x @ w1.T + b1, 0.0) @ w2.T + b2
    assert jnp.allclose(out, ref_f32, atol=5e-2, rtol=5e-2), \
        float(jnp.max(jnp.abs(out - ref_f32)))

    print("KERNEL_OK")
</pallas_src>

<mosaic_0001>
module attributes {stable_mosaic.version = 11 : i64} {
  func.func @digit_model_kernel(%arg0: i32, %arg1: memref<256x128xbf16, #tpu.memory_space<vmem>>, %arg2: memref<128x128xbf16, #tpu.memory_space<vmem>>, %arg3: memref<1x128xf32, #tpu.memory_space<vmem>>, %arg4: memref<128x128xbf16, #tpu.memory_space<vmem>>, %arg5: memref<1x128xf32, #tpu.memory_space<vmem>>, %arg6: memref<256x128xf32, #tpu.memory_space<vmem>>) attributes {dimension_semantics = [#tpu.dimension_semantics<parallel>], iteration_bounds = array<i64: 2>, scalar_prefetch = 0 : i64, scratch_operands = 0 : i64, tpu.core_type = #tpu.core_type<tc>, window_params = [{transform_indices = @transform_0, window_bounds = array<i64: 256, 128>}, {pipeline_mode = #tpu.pipeline_mode<synchronous>, transform_indices = @transform_1, window_bounds = array<i64: 128, 128>}, {pipeline_mode = #tpu.pipeline_mode<synchronous>, transform_indices = @transform_2, window_bounds = array<i64: 1, 128>}, {pipeline_mode = #tpu.pipeline_mode<synchronous>, transform_indices = @transform_3, window_bounds = array<i64: 128, 128>}, {pipeline_mode = #tpu.pipeline_mode<synchronous>, transform_indices = @transform_4, window_bounds = array<i64: 1, 128>}, {transform_indices = @transform_5, window_bounds = array<i64: 256, 128>}]} {
    %c0 = arith.constant 0 : index
    %c0_0 = arith.constant 0 : index
    %0 = vector.load %arg1[%c0, %c0_0] : memref<256x128xbf16, #tpu.memory_space<vmem>>, vector<256x128xbf16>
    %c0_1 = arith.constant 0 : index
    %c0_2 = arith.constant 0 : index
    %1 = vector.load %arg2[%c0_1, %c0_2] : memref<128x128xbf16, #tpu.memory_space<vmem>>, vector<128x128xbf16>
    %cst = arith.constant dense<0.000000e+00> : vector<256x128xf32>
    %2 = tpu.matmul %0, %1, %cst {dimension_numbers = #tpu.dot_dimension_numbers<[1], [0], [0], [1], [0, 0, 1, 1], [], []>} : vector<256x128xbf16>, vector<128x128xbf16>, vector<256x128xf32> -> vector<256x128xf32>
    %c0_3 = arith.constant 0 : index
    %c0_4 = arith.constant 0 : index
    %3 = vector.load %arg3[%c0_3, %c0_4] : memref<1x128xf32, #tpu.memory_space<vmem>>, vector<1x128xf32>
    %4 = vector.broadcast %3 : vector<1x128xf32> to vector<256x128xf32>
    %5 = arith.addf %2, %4 : vector<256x128xf32>
    %cst_5 = arith.constant 0.000000e+00 : f32
    %6 = vector.broadcast %cst_5 : f32 to vector<256x128xf32>
    %7 = arith.maximumf %5, %6 : vector<256x128xf32>
    %8 = arith.truncf %7 : vector<256x128xf32> to vector<256x128xbf16>
    %c0_6 = arith.constant 0 : index
    %c0_7 = arith.constant 0 : index
    %9 = vector.load %arg4[%c0_6, %c0_7] : memref<128x128xbf16, #tpu.memory_space<vmem>>, vector<128x128xbf16>
    %cst_8 = arith.constant dense<0.000000e+00> : vector<256x128xf32>
    %10 = tpu.matmul %8, %9, %cst_8 {dimension_numbers = #tpu.dot_dimension_numbers<[1], [0], [0], [1], [0, 0, 1, 1], [], []>} : vector<256x128xbf16>, vector<128x128xbf16>, vector<256x128xf32> -> vector<256x128xf32>
    %c0_9 = arith.constant 0 : index
    %c0_10 = arith.constant 0 : index
    %11 = vector.load %arg5[%c0_9, %c0_10] : memref<1x128xf32, #tpu.memory_space<vmem>>, vector<1x128xf32>
    %12 = vector.broadcast %11 : vector<1x128xf32> to vector<256x128xf32>
    %13 = arith.addf %10, %12 : vector<256x128xf32>
    %c0_11 = arith.constant 0 : index
    %c0_12 = arith.constant 0 : index
    %14 = vector.load %arg6[%c0_11, %c0_12] : memref<256x128xf32, #tpu.memory_space<vmem>>, vector<256x128xf32>
    tpu.vector_store %arg6[%c0_11, %c0_12], %13 {strides = array<i32>} : memref<256x128xf32, #tpu.memory_space<vmem>>, vector<256x128xf32>,
    return
  }
  func.func @transform_0(%arg0: i32) -> (i32, i32) {
    %c0_i32 = arith.constant 0 : i32
    %c0_i32_0 = arith.constant 0 : i32
    return %arg0, %c0_i32 : i32, i32
  }
  func.func @transform_1(%arg0: i32) -> (i32, i32) {
    %c0_i32 = arith.constant 0 : i32
    %c0_i32_0 = arith.constant 0 : i32
    %c0_i32_1 = arith.constant 0 : i32
    return %c0_i32, %c0_i32_0 : i32, i32
  }
  func.func @transform_2(%arg0: i32) -> (i32, i32) {
    %c0_i32 = arith.constant 0 : i32
    %c0_i32_0 = arith.constant 0 : i32
    %c0_i32_1 = arith.constant 0 : i32
    return %c0_i32, %c0_i32_0 : i32, i32
  }
  func.func @transform_3(%arg0: i32) -> (i32, i32) {
    %c0_i32 = arith.constant 0 : i32
    %c0_i32_0 = arith.constant 0 : i32
    %c0_i32_1 = arith.constant 0 : i32
    return %c0_i32, %c0_i32_0 : i32, i32
  }
  func.func @transform_4(%arg0: i32) -> (i32, i32) {
    %c0_i32 = arith.constant 0 : i32
    %c0_i32_0 = arith.constant 0 : i32
    %c0_i32_1 = arith.constant 0 : i32
    return %c0_i32, %c0_i32_0 : i32, i32
  }
  func.func @transform_5(%arg0: i32) -> (i32, i32) {
    %c0_i32 = arith.constant 0 : i32
    %c0_i32_0 = arith.constant 0 : i32
    return %arg0, %c0_i32 : i32, i32
  }
}

</mosaic_0001>

<llo_original>
// kernel: digit_model_forward.1
$region0: #{digit_model_forward.1}
  #allocation0 [shape = 'u32[]', space=smem, size = 0x4, offset = 0x4, fixed_abs, tag = 'smem constant byte address 0x4 - core index']
  #allocation1 [shape = 'u32[72,128]{1,0:T(1,128)}', space=vmem, size = 0x9000, scoped, tag = 'internal scratch']
  %s0 = inlined_call_operand.vmem [shape: bf16[512,128], index: 0, kind: input, shape index: {}]
  %s1 = inlined_call_operand.vmem [shape: bf16[128,128], index: 1, kind: input, shape index: {}]
  %s2 = inlined_call_operand.vmem [shape: f32[1,128], index: 2, kind: input, shape index: {}]
  %s3 = inlined_call_operand.vmem [shape: bf16[128,128], index: 3, kind: input, shape index: {}]
  %s4 = inlined_call_operand.vmem [shape: f32[1,128], index: 4, kind: input, shape index: {}]
  %s5 = inlined_call_operand.vmem [shape: f32[512,128], index: 5, kind: output, shape index: {}]
  %s6 = sld [smem:[#allocation0]]
  $region53: #{digit_model_forward.1} parent=0
    _
  %s8 = ssub.s32 1, %s6
  %s9 = scalar_select 0, %s8, %s6
  loop: start=0, step=1, limit=4
  $region2: #{digit_model_forward.1} parent=0 // loop_pre_header
    _
  $region3: #{digit_model_forward.1} parent=0 // loop_header
    %s11 = sphi 0, %s15
    %p12 = scmp.ge.s32.totalorder %s11, 4
    %s21 = sphi 0, %s23
    %s24 = sphi 0, %s21
    %s25 = sphi 0, %s24
    %s41 = sphi 0, %s25
    %s45 = sphi 0, %s45
    %s47 = sphi 0, %s45
    %s48 = sphi 0, %s47
    %s62 = sphi 0, %s48
    %s66 = sphi 0, %s66
    %s68 = sphi 0, %s66
    %s69 = sphi 0, %s68
    %s83 = sphi 0, %s69
    %s87 = sphi 0, %s87
    %s89 = sphi 0, %s87
    %s90 = sphi 0, %s89
    %s104 = sphi 0, %s90
    %s108 = sphi 0, %s108
    %s110 = sphi 0, %s108
    %s111 = sphi 0, %s110
    %s125 = sphi 0, %s111
    %s131 = sphi 0, %s133
    %s134 = sphi 0, %s131
    %s135 = sphi 0, %s134
    %s151 = sphi 0, %s135
  $region4: #{digit_model_forward.1} parent=0 // loop_header_branch
    %14 = sbr.rel (%p12) target = $region8
  $region5: #{digit_model_forward.1} parent=0 // loop_body
    %s16 = ssub.s32 %s11, 1
    %s17 = ssub.s32 %s11, 2
    %s18 = sadd.s32 %s11, 1
    %s19 = ssub.s32 %s11, %s18
    %p20 = scmp.eq.s32.totalorder %s19, 0
    %s22 = sadd.s32 %s21, 1
    %s23 = scalar_select %p20, %s21, %s22
    %p26 = pneg %p20
    %p27 = scmp.eq.s32.totalorder %s11, 1
    %p28 = por %p26, %p27
    %p29 = scmp.ne.s32.totalorder %s21, %s24
    %p30 = scmp.eq.s32.totalorder %s11, 0
    %p31 = por %p29, %p30
    %p32 = scmp.ne.s32.totalorder %s21, %s24
    %p33 = scmp.eq.s32.totalorder %s16, 1
    %p34 = por %p32, %p33
    %p35 = scmp.ne.s32.totalorder %s24, %s25
    %p36 = scmp.eq.s32.totalorder %s16, 0
    %p37 = por %p35, %p36
    %p38 = scmp.ne.s32.totalorder %s24, %s25
    %p39 = scmp.eq.s32.totalorder %s17, 1
    %p40 = por %p38, %p39
    %p42 = scmp.ne.s32.totalorder %s25, %s41
    %p43 = scmp.eq.s32.totalorder %s17, 0
    %p44 = por %p42, %p43
    %s46 = sadd.s32 %s45, 1
    %p49 = scmp.eq.s32.totalorder %s11, 1
    %p50 = scmp.ne.s32.totalorder %s45, %s47
    %p51 = scmp.eq.s32.totalorder %s11, 0
    %p52 = por %p50, %p51
    %p53 = scmp.ne.s32.totalorder %s45, %s47
    %p54 = scmp.eq.s32.totalorder %s16, 1
    %p55 = por %p53, %p54
    %p56 = scmp.ne.s32.totalorder %s47, %s48
    %p57 = scmp.eq.s32.totalorder %s16, 0
    %p58 = por %p56, %p57
    %p59 = scmp.ne.s32.totalorder %s47, %s48
    %p60 = scmp.eq.s32.totalorder %s17, 1
    %p61 = por %p59, %p60
    %p63 = scmp.ne.s32.totalorder %s48, %s62
    %p64 = scmp.eq.s32.totalorder %s17, 0
    %p65 = por %p63, %p64
    %s67 = sadd.s32 %s66, 1
    %p70 = scmp.eq.s32.totalorder %s11, 1
    %p71 = scmp.ne.s32.totalorder %s66, %s68
    %p72 = scmp.eq.s32.totalorder %s11, 0
    %p73 = por %p71, %p72
    %p74 = scmp.ne.s32.totalorder %s66, %s68
    %p75 = scmp.eq.s32.totalorder %s16, 1
    %p76 = por %p74, %p75
    %p77 = scmp.ne.s32.totalorder %s68, %s69
    %p78 = scmp.eq.s32.totalorder %s16, 0
    %p79 = por %p77, %p78
    %p80 = scmp.ne.s32.totalorder %s68, %s69
    %p81 = scmp.eq.s32.totalorder %s17, 1
    %p82 = por %p80, %p81
    %p84 = scmp.ne.s32.totalorder %s69, %s83
    %p85 = scmp.eq.s32.totalorder %s17, 0
    %p86 = por %p84, %p85
    %s88 = sadd.s32 %s87, 1
    %p91 = scmp.eq.s32.totalorder %s11, 1
    %p92 = scmp.ne.s32.totalorder %s87, %s89
    %p93 = scmp.eq.s32.totalorder %s11, 0
    %p94 = por %p92, %p93
    %p95 = scmp.ne.s32.totalorder %s87, %s89
    %p96 = scmp.eq.s32.totalorder %s16, 1
    %p97 = por %p95, %p96
    %p98 = scmp.ne.s32.totalorder %s89, %s90
    %p99 = scmp.eq.s32.totalorder %s16, 0
    %p100 = por %p98, %p99
    %p101 = scmp.ne.s32.totalorder %s89, %s90
    %p102 = scmp.eq.s32.totalorder %s17, 1
    %p103 = por %p101, %p102
    %p105 = scmp.ne.s32.totalorder %s90, %s104
    %p106 = scmp.eq.s32.totalorder %s17, 0
    %p107 = por %p105, %p106
    %s109 = sadd.s32 %s108, 1
    %p112 = scmp.eq.s32.totalorder %s11, 1
    %p113 = scmp.ne.s32.totalorder %s108, %s110
    %p114 = scmp.eq.s32.totalorder %s11, 0
    %p115 = por %p113, %p114
    %p116 = scmp.ne.s32.totalorder %s108, %s110
    %p117 = scmp.eq.s32.totalorder %s16, 1
    %p118 = por %p116, %p117
    %p119 = scmp.ne.s32.totalorder %s110, %s111
    %p120 = scmp.eq.s32.totalorder %s16, 0
    %p121 = por %p119, %p120
    %p122 = scmp.ne.s32.totalorder %s110, %s111
    %p123 = scmp.eq.s32.totalorder %s17, 1
    %p124 = por %p122, %p123
    %p126 = scmp.ne.s32.totalorder %s111, %s125
    %p127 = scmp.eq.s32.totalorder %s17, 0
    %p128 = por %p126, %p127
    %s129 = ssub.s32 %s11, %s18
    %p130 = scmp.eq.s32.totalorder %s129, 0
    %s132 = sadd.s32 %s131, 1
    %s133 = scalar_select %p130, %s131, %s132
    %p136 = pneg %p130
    %p137 = scmp.eq.s32.totalorder %s11, 1
    %p138 = por %p136, %p137
    %p139 = scmp.ne.s32.totalorder %s131, %s134
    %p140 = scmp.eq.s32.totalorder %s11, 0
    %p141 = por %p139, %p140
    %p142 = scmp.ne.s32.totalorder %s131, %s134
    %p143 = scmp.eq.s32.totalorder %s16, 1
    %p144 = por %p142, %p143
    %p145 = scmp.ne.s32.totalorder %s134, %s135
    %p146 = scmp.eq.s32.totalorder %s16, 0
    %p147 = por %p145, %p146
    %p148 = scmp.ne.s32.totalorder %s134, %s135
    %p149 = scmp.eq.s32.totalorder %s17, 1
    %p150 = por %p148, %p149
    %p152 = scmp.ne.s32.totalorder %s135, %s151
    %p153 = scmp.eq.s32.totalorder %s17, 0
    %p154 = por %p152, %p153
    %p155 = scmp.le.s32.totalorder 1, %s11
    %p156 = scmp.lt.s32.totalorder %s11, 3
    %p157 = pnand %p155, %p156
    %p158 = pneg %p157
    // Predicated region
    $region9: #{digit_model_forward.1} parent=5 // pred_check
      _
    $region10: #{digit_model_forward.1} parent=5 // pred_check_branch
      %160 = sbr.rel (%p157) target = $region12
    $region11: #{digit_model_forward.1} parent=5 // pred_region
      %s161 = ssub.s32 %s11, 1
      // Predicated region
      $region13: #{digit_model_forward.1} parent=11 // pred_check
        %p162 = pneg %p58
      $region14: #{digit_model_forward.1} parent=11 // pred_check_branch
        %164 = sbr.rel (%p162) target = $region16
      $region15: #{digit_model_forward.1} parent=11 // pred_region
        _
      $region16: #{digit_model_forward.1} parent=11 // pred_fallthru
        _
      // Predicated region
      $region17: #{digit_model_forward.1} parent=11 // pred_check
        %p165 = pneg %p79
      $region18: #{digit_model_forward.1} parent=11 // pred_check_branch
        %167 = sbr.rel (%p165) target = $region20
      $region19: #{digit_model_forward.1} parent=11 // pred_region
        _
      $region20: #{digit_model_forward.1} parent=11 // pred_fallthru
        _
      // Predicated region
      $region21: #{digit_model_forward.1} parent=11 // pred_check
        %p168 = pneg %p100
      $region22: #{digit_model_forward.1} parent=11 // pred_check_branch
        %170 = sbr.rel (%p168) target = $region24
      $region23: #{digit_model_forward.1} parent=11 // pred_region
        _
      $region24: #{digit_model_forward.1} parent=11 // pred_fallthru
        _
      // Predicated region
      $region25: #{digit_model_forward.1} parent=11 // pred_check
        %p171 = pneg %p121
      $region26: #{digit_model_forward.1} parent=11 // pred_check_branch
        %173 = sbr.rel (%p171) target = $region28
      $region27: #{digit_model_forward.1} parent=11 // pred_region
        _
      $region28: #{digit_model_forward.1} parent=11 // pred_fallthru
        _
    $region12: #{digit_model_forward.1} parent=5 // pred_fallthru
      _
    %p174 = scmp.lt.s32.totalorder %s11, 2
    // Predicated region
    $region29: #{digit_model_forward.1} parent=5 // pred_check
      %p175 = pneg %p174
    $region30: #{digit_model_forward.1} parent=5 // pred_check_branch
      %177 = sbr.rel (%p175) target = $region32
    $region31: #{digit_model_forward.1} parent=5 // pred_region
      // Predicated region
      $region33: #{digit_model_forward.1} parent=31 // pred_check
        %p178 = pneg %p31
      $region34: #{digit_model_forward.1} parent=31 // pred_check_branch
        %180 = sbr.rel (%p178) target = $region36
      $region35: #{digit_model_forward.1} parent=31 // pred_region
        %s181 = smul.u32 32, %s11
        %p182 = scmp.lt.s32.totalorder %s181, 63
        %s183 = scalar_select %p182, %s181, 63
        %s184 = smul.addr %s183, 4
        %s185 = scalar_lea.vmem %s0, %s184
        %s186 = smul.u32 32, %s11
      $region36: #{digit_model_forward.1} parent=31 // pred_fallthru
        _
    $region32: #{digit_model_forward.1} parent=5 // pred_fallthru
      _
    %p187 = scmp.le.s32.totalorder 1, %s11
    %p188 = scmp.lt.s32.totalorder %s11, 3
    %p189 = pnand %p187, %p188
    %p190 = pneg %p189
    // Predicated region
    $region37: #{digit_model_forward.1} parent=5 // pred_check
      _
    $region38: #{digit_model_forward.1} parent=5 // pred_check_branch
      %192 = sbr.rel (%p189) target = $region40
    $region39: #{digit_model_forward.1} parent=5 // pred_region
      %s193 = ssub.s32 %s11, 1
      %s194 = smul.u32 32, %s16
      %p195 = scmp.lt.s32.totalorder %s194, 63
      %s196 = scalar_select %p195, %s194, 63
      %s197 = smul.addr %s196, 4
      %s198 = scalar_lea.vmem %s0, %s197
      %p199 = pneg %p37
      %p200 = pneg %p34
      %p201 = pneg %p58
      %p202 = pneg %p55
      %p203 = pneg %p79
      %p204 = pneg %p76
      %p205 = pneg %p100
      %p206 = pneg %p97
      %p207 = pneg %p121
      %p208 = pneg %p118
      %p209 = pneg %p147
      %p210 = pneg %p144
      %s211 = smul.u32 32, %s16
      %p212 = scmp.lt.s32.totalorder %s211, 63
      %s213 = scalar_select %p212, %s211, 63
      %s214 = smul.addr %s213, 8
      %s215 = scalar_lea.vmem %s5, %s214
      %s216 = smul.u32 32, %s16
      %p217 = scmp.lt.s32.totalorder %s216, 63
      %s218 = scalar_select %p217, %s216, 63
      %s219 = smul.addr %s218, 4
      %s220 = scalar_lea.vmem %s0, %s219
      %s221 = smul.u32 32, %s16
      %s222 = smul.u32 32, %s16
      %p223 = scmp.lt.s32.totalorder %s222, 63
      %s224 = scalar_select %p223, %s222, 63
      %s225 = smul.addr %s224, 8
      %s226 = scalar_lea.vmem %s5, %s225
      %s227 = smul.u32 32, %s16
      %v228 = vld [vmem:[%s220] sm:$0xf]
      %v229 = vld [vmem:[%s220 + $0x4] sm:$0xf]
      %v230 = vld [vmem:[%s220 + $0x8] sm:$0xf]
      %v231 = vld [vmem:[%s220 + $0xc] sm:$0xf]
      %v232 = vld [vmem:[%s220 + $0x10] sm:$0xf]
      %v233 = vld [vmem:[%s220 + $0x14] sm:$0xf]
      %v234 = vld [vmem:[%s220 + $0x18] sm:$0xf]
      %v235 = vld [vmem:[%s220 + $0x1c] sm:$0xf]
      %v236 = vld [vmem:[%s220 + $0x20] sm:$0xf]
      %v237 = vld [vmem:[%s220 + $0x24] sm:$0xf]
      %v238 = vld [vmem:[%s220 + $0x28] sm:$0xf]
      %v239 = vld [vmem:[%s220 + $0x2c] sm:$0xf]
      %v240 = vld [vmem:[%s220 + $0x30] sm:$0xf]
      %v241 = vld [vmem:[%s220 + $0x34] sm:$0xf]
      %v242 = vld [vmem:[%s220 + $0x38] sm:$0xf]
      %v243 = vld [vmem:[%s220 + $0x3c] sm:$0xf]
      %v244 = vld [vmem:[%s220 + $0x40] sm:$0xf]
      %v245 = vld [vmem:[%s220 + $0x44] sm:$0xf]
      %v246 = vld [vmem:[%s220 + $0x48] sm:$0xf]
      %v247 = vld [vmem:[%s220 + $0x4c] sm:$0xf]
      %v248 = vld [vmem:[%s220 + $0x50] sm:$0xf]
      %v249 = vld [vmem:[%s220 + $0x54] sm:$0xf]
      %v250 = vld [vmem:[%s220 + $0x58] sm:$0xf]
      %v251 = vld [vmem:[%s220 + $0x5c] sm:$0xf]
      %v252 = vld [vmem:[%s220 + $0x60] sm:$0xf]
      %v253 = vld [vmem:[%s220 + $0x64] sm:$0xf]
      %v254 = vld [vmem:[%s220 + $0x68] sm:$0xf]
      %v255 = vld [vmem:[%s220 + $0x6c] sm:$0xf]
      %v256 = vld [vmem:[%s220 + $0x70] sm:$0xf]
      %v257 = vld [vmem:[%s220 + $0x74] sm:$0xf]
      %v258 = vld [vmem:[%s220 + $0x78] sm:$0xf]
      %v259 = vld [vmem:[%s220 + $0x7c] sm:$0xf]
      %v260 = vld [vmem:[%s1] sm:$0xf]
      %v261 = vld [vmem:[%s1 + $0x4] sm:$0xf]
      %v262 = vld [vmem:[%s1 + $0x8] sm:$0xf]
      %v263 = vld [vmem:[%s1 + $0xc] sm:$0xf]
      %v264 = vld [vmem:[%s1 + $0x10] sm:$0xf]
      %v265 = vld [vmem:[%s1 + $0x14] sm:$0xf]
      %v266 = vld [vmem:[%s1 + $0x18] sm:$0xf]
      %v267 = vld [vmem:[%s1 + $0x1c] sm:$0xf]
      %v268 = vld [vmem:[%s1 + $0x20] sm:$0xf]
      %v269 = vld [vmem:[%s1 + $0x24] sm:$0xf]
      %v270 = vld [vmem:[%s1 + $0x28] sm:$0xf]
      %v271 = vld [vmem:[%s1 + $0x2c] sm:$0xf]
      %v272 = vld [vmem:[%s1 + $0x30] sm:$0xf]
      %v273 = vld [vmem:[%s1 + $0x34] sm:$0xf]
      %v274 = vld [vmem:[%s1 + $0x38] sm:$0xf]
      %v275 = vld [vmem:[%s1 + $0x3c] sm:$0xf]
      %v276 = vld [vmem:[%s2] sm:$0x1]
      %v278 = vperm.slane %v276, 0
      %v312 = vunpack.c.l.b16 %v228
      %v313 = vunpack.c.l.b16 %v229
      %v314 = vunpack.c.l.b16 %v230
      %v315 = vunpack.c.l.b16 %v231
      %v316 = vunpack.c.l.b16 %v232
      %v317 = vunpack.c.l.b16 %v233
      %v318 = vunpack.c.l.b16 %v234
      %v319 = vunpack.c.l.b16 %v235
      %v320 = vunpack.c.l.b16 %v236
      %v321 = vunpack.c.l.b16 %v237
      %v322 = vunpack.c.l.b16 %v238
      %v323 = vunpack.c.l.b16 %v239
      %v324 = vunpack.c.l.b16 %v240
      %v325 = vunpack.c.l.b16 %v241
      %v326 = vunpack.c.l.b16 %v242
      %v327 = vunpack.c.l.b16 %v243
      %v328 = vunpack.c.l.b16 %v244
      %v329 = vunpack.c.l.b16 %v245
      %v330 = vunpack.c.l.b16 %v246
      %v331 = vunpack.c.l.b16 %v247
      %v332 = vunpack.c.l.b16 %v248
      %v333 = vunpack.c.l.b16 %v249
      %v334 = vunpack.c.l.b16 %v250
      %v335 = vunpack.c.l.b16 %v251
      %v336 = vunpack.c.l.b16 %v252
      %v337 = vunpack.c.l.b16 %v253
      %v338 = vunpack.c.l.b16 %v254
      %v339 = vunpack.c.l.b16 %v255
      %v340 = vunpack.c.l.b16 %v256
      %v341 = vunpack.c.l.b16 %v257
      %v342 = vunpack.c.l.b16 %v258
      %v343 = vunpack.c.l.b16 %v259
      %v344 = vpack.c.b16 %v313, %v312
      %v345 = vpack.c.b16 %v315, %v314
      %v346 = vpack.c.b16 %v317, %v316
      %v347 = vpack.c.b16 %v319, %v318
      %v348 = vpack.c.b16 %v321, %v320
      %v349 = vpack.c.b16 %v323, %v322
      %v350 = vpack.c.b16 %v325, %v324
      %v351 = vpack.c.b16 %v327, %v326
      %v352 = vpack.c.b16 %v329, %v328
      %v353 = vpack.c.b16 %v331, %v330
      %v354 = vpack.c.b16 %v333, %v332
      %v355 = vpack.c.b16 %v335, %v334
      %v356 = vpack.c.b16 %v337, %v336
      %v357 = vpack.c.b16 %v339, %v338
      %v358 = vpack.c.b16 %v341, %v340
      %v359 = vpack.c.b16 %v343, %v342
      %v392 = vunpack.c.l.b16 %v260
      %v393 = vunpack.c.l.b16 %v261
      %v394 = vunpack.c.l.b16 %v262
      %v395 = vunpack.c.l.b16 %v263
      %v396 = vunpack.c.l.b16 %v264
      %v397 = vunpack.c.l.b16 %v265
      %v398 = vunpack.c.l.b16 %v266
      %v399 = vunpack.c.l.b16 %v267
      %v400 = vunpack.c.l.b16 %v268
      %v401 = vunpack.c.l.b16 %v269
      %v402 = vunpack.c.l.b16 %v270
      %v403 = vunpack.c.l.b16 %v271
      %v404 = vunpack.c.l.b16 %v272
      %v405 = vunpack.c.l.b16 %v273
      %v406 = vunpack.c.l.b16 %v274
      %v407 = vunpack.c.l.b16 %v275
      %v408 = vpack.c.b16 %v393, %v392
      %v409 = vpack.c.b16 %v395, %v394
      %v410 = vpack.c.b16 %v397, %v396
      %v411 = vpack.c.b16 %v399, %v398
      %v412 = vpack.c.b16 %v401, %v400
      %v413 = vpack.c.b16 %v403, %v402
      %v414 = vpack.c.b16 %v405, %v404
      %v415 = vpack.c.b16 %v407, %v406
      %424 = vmatpush.bf16.msra.mxu0 %v415
      %425 = vmatpush.bf16.msra.mxu0 %v414
      %426 = vmatpush.bf16.msra.mxu0 %v413
      %427 = vmatpush.bf16.msra.mxu0 %v412
      %428 = vmatpush.bf16.msra.mxu0 %v411
      %429 = vmatpush.bf16.msra.mxu0 %v410
      %430 = vmatpush.bf16.msra.mxu0 %v409
      %431 = vmatpush.bf16.msra.mxu0 %v408
      %432 = vmatmul.bf16.gmra.mxu0 %v344
      %v433 = vpop.f32.mrf.mxu0
      %v434 = vadd.f32 %v278, %v433
      %v435 = vpop.f32.mrf.mxu0
      %v436 = vadd.f32 %v278, %v435
      %437 = vmatmul.bf16.gmra.mxu0 %v345
      %v438 = vpop.f32.mrf.mxu0
      %v439 = vadd.f32 %v278, %v438
      %v440 = vpop.f32.mrf.mxu0
      %v441 = vadd.f32 %v278, %v440
      %442 = vmatmul.bf16.gmra.mxu0 %v346
      %v443 = vpop.f32.mrf.mxu0
      %v444 = vadd.f32 %v278, %v443
      %v445 = vpop.f32.mrf.mxu0
      %v446 = vadd.f32 %v278, %v445
      %447 = vmatmul.bf16.gmra.mxu0 %v347
      %v448 = vpop.f32.mrf.mxu0
      %v449 = vadd.f32 %v278, %v448
      %v450 = vpop.f32.mrf.mxu0
      %v451 = vadd.f32 %v278, %v450
      %452 = vmatmul.bf16.gmra.mxu0 %v348
      %v453 = vpop.f32.mrf.mxu0
      %v454 = vadd.f32 %v278, %v453
      %v455 = vpop.f32.mrf.mxu0
      %v456 = vadd.f32 %v278, %v455
      %457 = vmatmul.bf16.gmra.mxu0 %v349
      %v458 = vpop.f32.mrf.mxu0
      %v459 = vadd.f32 %v278, %v458
      %v460 = vpop.f32.mrf.mxu0
      %v461 = vadd.f32 %v278, %v460
      %462 = vmatmul.bf16.gmra.mxu0 %v350
      %v463 = vpop.f32.mrf.mxu0
      %v464 = vadd.f32 %v278, %v463
      %v465 = vpop.f32.mrf.mxu0
      %v466 = vadd.f32 %v278, %v465
      %467 = vmatmul.bf16.gmra.mxu0 %v351
      %v468 = vpop.f32.mrf.mxu0
      %v469 = vadd.f32 %v278, %v468
      %v470 = vpop.f32.mrf.mxu0
      %v471 = vadd.f32 %v278, %v470
      %472 = vmatmul.bf16.gmra.mxu0 %v352
      %v473 = vpop.f32.mrf.mxu0
      %v474 = vadd.f32 %v278, %v473
      %v475 = vpop.f32.mrf.mxu0
      %v476 = vadd.f32 %v278, %v475
      %477 = vmatmul.bf16.gmra.mxu0 %v353
      %v478 = vpop.f32.mrf.mxu0
      %v479 = vadd.f32 %v278, %v478
      %v480 = vpop.f32.mrf.mxu0
      %v481 = vadd.f32 %v278, %v480
      %482 = vmatmul.bf16.gmra.mxu0 %v354
      %v483 = vpop.f32.mrf.mxu0
      %v484 = vadd.f32 %v278, %v483
      %v485 = vpop.f32.mrf.mxu0
      %v486 = vadd.f32 %v278, %v485
      %487 = vmatmul.bf16.gmra.mxu0 %v355
      %v488 = vpop.f32.mrf.mxu0
      %v489 = vadd.f32 %v278, %v488
      %v490 = vpop.f32.mrf.mxu0
      %v491 = vadd.f32 %v278, %v490
      %492 = vmatmul.bf16.gmra.mxu0 %v356
      %v493 = vpop.f32.mrf.mxu0
      %v494 = vadd.f32 %v278, %v493
      %v495 = vpop.f32.mrf.mxu0
      %v496 = vadd.f32 %v278, %v495
      %497 = vmatmul.bf16.gmra.mxu0 %v357
      %v498 = vpop.f32.mrf.mxu0
      %v499 = vadd.f32 %v278, %v498
      %v500 = vpop.f32.mrf.mxu0
      %v501 = vadd.f32 %v278, %v500
      %502 = vmatmul.bf16.gmra.mxu0 %v358
      %v503 = vpop.f32.mrf.mxu0
      %v504 = vadd.f32 %v278, %v503
      %v505 = vpop.f32.mrf.mxu0
      %v506 = vadd.f32 %v278, %v505
      %507 = vmatmul.bf16.gmra.mxu0 %v359
      %v508 = vpop.f32.mrf.mxu0
      %v509 = vadd.f32 %v278, %v508
      %v510 = vpop.f32.mrf.mxu0
      %v511 = vadd.f32 %v278, %v510
      %512 = vdwg.mxu0
      %v513 = vmax.f32 %v434, 0.0
      %v514 = vmax.f32 %v436, 0.0
      %v515 = vmax.f32 %v439, 0.0
      %v516 = vmax.f32 %v441, 0.0
      %v517 = vmax.f32 %v444, 0.0
      %v518 = vmax.f32 %v446, 0.0
      %v519 = vmax.f32 %v449, 0.0
      %v520 = vmax.f32 %v451, 0.0
      %v521 = vmax.f32 %v454, 0.0
      %v522 = vmax.f32 %v456, 0.0
      %v523 = vmax.f32 %v459, 0.0
      %v524 = vmax.f32 %v461, 0.0
      %v525 = vmax.f32 %v464, 0.0
      %v526 = vmax.f32 %v466, 0.0
      %v527 = vmax.f32 %v469, 0.0
      %v528 = vmax.f32 %v471, 0.0
      %v529 = vmax.f32 %v474, 0.0
      %v530 = vmax.f32 %v476, 0.0
      %v531 = vmax.f32 %v479, 0.0
      %v532 = vmax.f32 %v481, 0.0
      %v533 = vmax.f32 %v484, 0.0
      %v534 = vmax.f32 %v486, 0.0
      %v535 = vmax.f32 %v489, 0.0
      %v536 = vmax.f32 %v491, 0.0
      %v537 = vmax.f32 %v494, 0.0
      %v538 = vmax.f32 %v496, 0.0
      %v539 = vmax.f32 %v499, 0.0
      %v540 = vmax.f32 %v501, 0.0
      %v541 = vmax.f32 %v504, 0.0
      %v542 = vmax.f32 %v506, 0.0
      %v543 = vmax.f32 %v509, 0.0
      %v544 = vmax.f32 %v511, 0.0
      %v545 = vpack.c.bf16 %v514, %v513
      %v546 = vpack.c.bf16 %v516, %v515
      %v547 = vpack.c.bf16 %v518, %v517
      %v548 = vpack.c.bf16 %v520, %v519
      %v549 = vpack.c.bf16 %v522, %v521
      %v550 = vpack.c.bf16 %v524, %v523
      %v551 = vpack.c.bf16 %v526, %v525
      %v552 = vpack.c.bf16 %v528, %v527
      %v553 = vpack.c.bf16 %v530, %v529
      %v554 = vpack.c.bf16 %v532, %v531
      %v555 = vpack.c.bf16 %v534, %v533
      %v556 = vpack.c.bf16 %v536, %v535
      %v557 = vpack.c.bf16 %v538, %v537
      %v558 = vpack.c.bf16 %v540, %v539
      %v559 = vpack.c.bf16 %v542, %v541
      %v560 = vpack.c.bf16 %v544, %v543
      %v561 = vld [vmem:[%s3] sm:$0xf]
      %v562 = vld [vmem:[%s3 + $0x4] sm:$0xf]
      %v563 = vld [vmem:[%s3 + $0x8] sm:$0xf]
      %v564 = vld [vmem:[%s3 + $0xc] sm:$0xf]
      %v565 = vld [vmem:[%s3 + $0x10] sm:$0xf]
      %v566 = vld [vmem:[%s3 + $0x14] sm:$0xf]
      %v567 = vld [vmem:[%s3 + $0x18] sm:$0xf]
      %v568 = vld [vmem:[%s3 + $0x1c] sm:$0xf]
      %v569 = vld [vmem:[%s3 + $0x20] sm:$0xf]
      %v570 = vld [vmem:[%s3 + $0x24] sm:$0xf]
      %v571 = vld [vmem:[%s3 + $0x28] sm:$0xf]
      %v572 = vld [vmem:[%s3 + $0x2c] sm:$0xf]
      %v573 = vld [vmem:[%s3 + $0x30] sm:$0xf]
      %v574 = vld [vmem:[%s3 + $0x34] sm:$0xf]
      %v575 = vld [vmem:[%s3 + $0x38] sm:$0xf]
      %v576 = vld [vmem:[%s3 + $0x3c] sm:$0xf]
      %v577 = vld [vmem:[%s4] sm:$0x1]
      %v579 = vperm.slane %v577, 0
      %v597 = vunpack.c.l.b16 %v561
      %v598 = vunpack.c.l.b16 %v562
      %v599 = vunpack.c.l.b16 %v563
      %v600 = vunpack.c.l.b16 %v564
      %v601 = vunpack.c.l.b16 %v565
      %v602 = vunpack.c.l.b16 %v566
      %v603 = vunpack.c.l.b16 %v567
      %v604 = vunpack.c.l.b16 %v568
      %v605 = vunpack.c.l.b16 %v569
      %v606 = vunpack.c.l.b16 %v570
      %v607 = vunpack.c.l.b16 %v571
      %v608 = vunpack.c.l.b16 %v572
      %v609 = vunpack.c.l.b16 %v573
      %v610 = vunpack.c.l.b16 %v574
      %v611 = vunpack.c.l.b16 %v575
      %v612 = vunpack.c.l.b16 %v576
      %v613 = vpack.c.b16 %v598, %v597
      %v614 = vpack.c.b16 %v600, %v599
      %v615 = vpack.c.b16 %v602, %v601
      %v616 = vpack.c.b16 %v604, %v603
      %v617 = vpack.c.b16 %v606, %v605
      %v618 = vpack.c.b16 %v608, %v607
      %v619 = vpack.c.b16 %v610, %v609
      %v620 = vpack.c.b16 %v612, %v611
      %629 = vmatpush.bf16.msra.mxu0 %v620
      %630 = vmatpush.bf16.msra.mxu0 %v619
      %631 = vmatpush.bf16.msra.mxu0 %v618
      %632 = vmatpush.bf16.msra.mxu0 %v617
      %633 = vmatpush.bf16.msra.mxu0 %v616
      %634 = vmatpush.bf16.msra.mxu0 %v615
      %635 = vmatpush.bf16.msra.mxu0 %v614
      %636 = vmatpush.bf16.msra.mxu0 %v613
      %637 = vmatmul.bf16.gmra.mxu0 %v545
      %v638 = vpop.f32.mrf.mxu0
      %v639 = vadd.f32 %v579, %v638
      %v640 = vpop.f32.mrf.mxu0
      %v641 = vadd.f32 %v579, %v640
      %642 = vmatmul.bf16.gmra.mxu0 %v546
      %v643 = vpop.f32.mrf.mxu0
      %v644 = vadd.f32 %v579, %v643
      %v645 = vpop.f32.mrf.mxu0
      %v646 = vadd.f32 %v579, %v645
      %647 = vmatmul.bf16.gmra.mxu0 %v547
      %v648 = vpop.f32.mrf.mxu0
      %v649 = vadd.f32 %v579, %v648
      %v650 = vpop.f32.mrf.mxu0
      %v651 = vadd.f32 %v579, %v650
      %652 = vmatmul.bf16.gmra.mxu0 %v548
      %v653 = vpop.f32.mrf.mxu0
      %v654 = vadd.f32 %v579, %v653
      %v655 = vpop.f32.mrf.mxu0
      %v656 = vadd.f32 %v579, %v655
      %657 = vmatmul.bf16.gmra.mxu0 %v549
      %v658 = vpop.f32.mrf.mxu0
      %v659 = vadd.f32 %v579, %v658
      %v660 = vpop.f32.mrf.mxu0
      %v661 = vadd.f32 %v579, %v660
      %662 = vmatmul.bf16.gmra.mxu0 %v550
      %v663 = vpop.f32.mrf.mxu0
      %v664 = vadd.f32 %v579, %v663
      %v665 = vpop.f32.mrf.mxu0
      %v666 = vadd.f32 %v579, %v665
      %667 = vmatmul.bf16.gmra.mxu0 %v551
      %v668 = vpop.f32.mrf.mxu0
      %v669 = vadd.f32 %v579, %v668
      %v670 = vpop.f32.mrf.mxu0
      %v671 = vadd.f32 %v579, %v670
      %672 = vmatmul.bf16.gmra.mxu0 %v552
      %v673 = vpop.f32.mrf.mxu0
      %v674 = vadd.f32 %v579, %v673
      %v675 = vpop.f32.mrf.mxu0
      %v676 = vadd.f32 %v579, %v675
      %677 = vmatmul.bf16.gmra.mxu0 %v553
      %v678 = vpop.f32.mrf.mxu0
      %v679 = vadd.f32 %v579, %v678
      %v680 = vpop.f32.mrf.mxu0
      %v681 = vadd.f32 %v579, %v680
      %682 = vmatmul.bf16.gmra.mxu0 %v554
      %v683 = vpop.f32.mrf.mxu0
      %v684 = vadd.f32 %v579, %v683
      %v685 = vpop.f32.mrf.mxu0
      %v686 = vadd.f32 %v579, %v685
      %687 = vmatmul.bf16.gmra.mxu0 %v555
      %v688 = vpop.f32.mrf.mxu0
      %v689 = vadd.f32 %v579, %v688
      %v690 = vpop.f32.mrf.mxu0
      %v691 = vadd.f32 %v579, %v690
      %692 = vmatmul.bf16.gmra.mxu0 %v556
      %v693 = vpop.f32.mrf.mxu0
      %v694 = vadd.f32 %v579, %v693
      %v695 = vpop.f32.mrf.mxu0
      %v696 = vadd.f32 %v579, %v695
      %697 = vmatmul.bf16.gmra.mxu0 %v557
      %v698 = vpop.f32.mrf.mxu0
      %v699 = vadd.f32 %v579, %v698
      %v700 = vpop.f32.mrf.mxu0
      %v701 = vadd.f32 %v579, %v700
      %702 = vmatmul.bf16.gmra.mxu0 %v558
      %v703 = vpop.f32.mrf.mxu0
      %v704 = vadd.f32 %v579, %v703
      %v705 = vpop.f32.mrf.mxu0
      %v706 = vadd.f32 %v579, %v705
      %707 = vmatmul.bf16.gmra.mxu0 %v559
      %v708 = vpop.f32.mrf.mxu0
      %v709 = vadd.f32 %v579, %v708
      %v710 = vpop.f32.mrf.mxu0
      %v711 = vadd.f32 %v579, %v710
      %712 = vmatmul.bf16.gmra.mxu0 %v560
      %v713 = vpop.f32.mrf.mxu0
      %v714 = vadd.f32 %v579, %v713
      %v715 = vpop.f32.mrf.mxu0
      %v716 = vadd.f32 %v579, %v715
      %717 = vdwg.mxu0
      %718 = vst [vmem:[%s226] sm:$0xff] %v639
      %719 = vst [vmem:[%s226 + $0x8] sm:$0xff] %v641
      %720 = vst [vmem:[%s226 + $0x10] sm:$0xff] %v644
      %721 = vst [vmem:[%s226 + $0x18] sm:$0xff] %v646
      %722 = vst [vmem:[%s226 + $0x20] sm:$0xff] %v649
      %723 = vst [vmem:[%s226 + $0x28] sm:$0xff] %v651
      %724 = vst [vmem:[%s226 + $0x30] sm:$0xff] %v654
      %725 = vst [vmem:[%s226 + $0x38] sm:$0xff] %v656
      %726 = vst [vmem:[%s226 + $0x40] sm:$0xff] %v659
      %727 = vst [vmem:[%s226 + $0x48] sm:$0xff] %v661
      %728 = vst [vmem:[%s226 + $0x50] sm:$0xff] %v664
      %729 = vst [vmem:[%s226 + $0x58] sm:$0xff] %v666
      %730 = vst [vmem:[%s226 + $0x60] sm:$0xff] %v669
      %731 = vst [vmem:[%s226 + $0x68] sm:$0xff] %v671
      %732 = vst [vmem:[%s226 + $0x70] sm:$0xff] %v674
      %733 = vst [vmem:[%s226 + $0x78] sm:$0xff] %v676
      %734 = vst [vmem:[%s226 + $0x80] sm:$0xff] %v679
      %735 = vst [vmem:[%s226 + $0x88] sm:$0xff] %v681
      %736 = vst [vmem:[%s226 + $0x90] sm:$0xff] %v684
      %737 = vst [vmem:[%s226 + $0x98] sm:$0xff] %v686
      %738 = vst [vmem:[%s226 + $0xa0] sm:$0xff] %v689
      %739 = vst [vmem:[%s226 + $0xa8] sm:$0xff] %v691
      %740 = vst [vmem:[%s226 + $0xb0] sm:$0xff] %v694
      %741 = vst [vmem:[%s226 + $0xb8] sm:$0xff] %v696
      %742 = vst [vmem:[%s226 + $0xc0] sm:$0xff] %v699
      %743 = vst [vmem:[%s226 + $0xc8] sm:$0xff] %v701
      %744 = vst [vmem:[%s226 + $0xd0] sm:$0xff] %v704
      %745 = vst [vmem:[%s226 + $0xd8] sm:$0xff] %v706
      %746 = vst [vmem:[%s226 + $0xe0] sm:$0xff] %v709
      %747 = vst [vmem:[%s226 + $0xe8] sm:$0xff] %v711
      %748 = vst [vmem:[%s226 + $0xf0] sm:$0xff] %v714
      %749 = vst [vmem:[%s226 + $0xf8] sm:$0xff] %v716
      %s750 = smul.u32 32, %s16
      %p751 = scmp.lt.s32.totalorder %s750, 63
      %s752 = scalar_select %p751, %s750, 63
      %s753 = smul.addr %s752, 8
      %s754 = scalar_lea.vmem %s5, %s753
      // Predicated region
      $region41: #{digit_model_forward.1} parent=39 // pred_check
        %p755 = pneg %p144
      $region42: #{digit_model_forward.1} parent=39 // pred_check_branch
        %757 = sbr.rel (%p755) target = $region44
      $region43: #{digit_model_forward.1} parent=39 // pred_region
        %s758 = smul.u32 32, %s16
      $region44: #{digit_model_forward.1} parent=39 // pred_fallthru
        _
    $region40: #{digit_model_forward.1} parent=5 // pred_fallthru
      _
    %p759 = scmp.le.s32.totalorder 2, %s11
    // Predicated region
    $region45: #{digit_model_forward.1} parent=5 // pred_check
      %p760 = pneg %p759
    $region46: #{digit_model_forward.1} parent=5 // pred_check_branch
      %762 = sbr.rel (%p760) target = $region48
    $region47: #{digit_model_forward.1} parent=5 // pred_region
      %s763 = ssub.s32 %s11, 2
      // Predicated region
      $region49: #{digit_model_forward.1} parent=47 // pred_check
        %p764 = pneg %p150
      $region50: #{digit_model_forward.1} parent=47 // pred_check_branch
        %766 = sbr.rel (%p764) target = $region52
      $region51: #{digit_model_forward.1} parent=47 // pred_region
        %s767 = smul.u32 32, %s17
        %p768 = scmp.lt.s32.totalorder %s767, 63
        %s769 = scalar_select %p768, %s767, 63
        %s770 = smul.addr %s769, 8
        %s771 = scalar_lea.vmem %s5, %s770
      $region52: #{digit_model_forward.1} parent=47 // pred_fallthru
        _
    $region48: #{digit_model_forward.1} parent=5 // pred_fallthru
      _
  $region6: #{digit_model_forward.1} parent=0 // loop_footer
    %s15 = sadd.s32 1, %s11
  $region7: #{digit_model_forward.1} parent=0 // loop_footer_branch
    %10 = sbr.rel target = $region3
  $region8: #{digit_model_forward.1} parent=0 // loop_exit
    _

</llo_original>
